<compile_context>
chip_gen: v6e
topology: v6e:2x2x1
jax: 0.10.0
libtpu: 0.0.40
codegen_flags: <defaults>
</compile_context>

<pallas_src>
import jax
import jax.numpy as jnp
from jax.experimental import pallas as pl
from jax.experimental.pallas import tpu as pltpu


def _masked_gap_kernel(feat_ref, cnt_ref, out_ref, acc_ref):
    """feat_ref: (TM, TL), cnt_ref: (TM, 1), out_ref: (TM, 1), acc_ref: (TM, lane)."""
    l = pl.program_id(1)

    @pl.when(l == 0)
    def _init():
        acc_ref[...] = jnp.zeros_like(acc_ref)

    feat = feat_ref[...]                                   # (TM, TL) f32
    lane = acc_ref.shape[-1]
    n_slices = feat.shape[-1] // lane
    # VPU elementwise accumulation of lane-wide slices (statically unrolled);
    # cross-lane XLU work is deferred to the finalize step.
    part = feat[:, 0:lane]
    for i in range(1, n_slices):
        part = part + feat[:, i * lane:(i + 1) * lane]
    acc_ref[...] += part

    @pl.when(l == pl.num_programs(1) - 1)
    def _finalize():
        row_sum = jnp.sum(acc_ref[...], axis=-1, keepdims=True)   # (TM, 1), one XLU reduce
        # Exact divide; matches the PyTorch reference semantics.
        # TODO(synk): rows with an all-zero mask yield inf/nan, identical to the
        # original module; clamp counts here if that case must be handled.
        out_ref[...] = row_sum / cnt_ref[...]


def masked_global_avg_pool1d(mask, features, *, tm=256, tl=2048):
    """mask: (B, L), features: (B, C, L) -> (B, C) float32."""
    B, C, L = features.shape
    assert mask.shape == (B, L), (mask.shape, (B, L))
    BC = B * C

    feat2d = features.reshape(BC, L).astype(jnp.float32)            # layout-only reshape
    counts = jnp.sum(mask.astype(jnp.float32), axis=-1)             # (B,)  == mask.sum(-1)
    cnt2d = jnp.broadcast_to(counts[:, None], (B, C)).reshape(BC, 1)

    # Tile selection: full extent when small (always legal), otherwise
    # (8, 128)-aligned tiles with arrays padded up to tile multiples.
    TM = BC if BC <= tm else tm          # tm must be a multiple of 8
    TL = L if L <= tl else tl            # tl must be a multiple of 128
    BCp = pl.cdiv(BC, TM) * TM
    Lp = pl.cdiv(L, TL) * TL
    if BCp != BC or Lp != L:
        feat2d = jnp.pad(feat2d, ((0, BCp - BC), (0, Lp - L)))                   # zeros: no effect on sums
        cnt2d = jnp.pad(cnt2d, ((0, BCp - BC), (0, 0)), constant_values=1.0)     # avoid 0/0 in dead rows

    lane = 128 if TL % 128 == 0 else TL
    grid = (BCp // TM, Lp // TL)

    out2d = pl.pallas_call(
        _masked_gap_kernel,
        out_shape=jax.ShapeDtypeStruct((BCp, 1), jnp.float32),
        grid_spec=pltpu.PrefetchScalarGridSpec(
            num_scalar_prefetch=0,
            grid=grid,
            in_specs=[
                pl.BlockSpec((TM, TL), lambda i, l: (i, l)),   # feature tiles, pipelined over L
                pl.BlockSpec((TM, 1), lambda i, l: (i, 0)),    # per-row counts (resident per row tile)
            ],
            out_specs=pl.BlockSpec((TM, 1), lambda i, l: (i, 0)),   # accumulator target across L
            scratch_shapes=[pltpu.VMEM((TM, lane), jnp.float32)],
        ),
        compiler_params=pltpu.CompilerParams(
            dimension_semantics=("parallel", "arbitrary"),   # rows shard across TCs, L is the reduction
            vmem_limit_bytes=32 * 1024 * 1024,
        ),
    )(feat2d, cnt2d)

    return out2d[:BC, 0].reshape(B, C)


if __name__ == "__main__":
    key = jax.random.PRNGKey(0)
    k1, k2 = jax.random.split(key)

    # --- primary small case (matches the module's expected shapes) ---
    B, C, L = 2, 4, 16
    features = jax.random.normal(k1, (B, C, L), dtype=jnp.float32)
    lens = jnp.array([11, 7], dtype=jnp.int32)
    mask = (jnp.arange(L)[None, :] < lens[:, None]).astype(jnp.float32)   # (B, L)

    out = jax.block_until_ready(masked_global_avg_pool1d(mask, features))
    ref = features.sum(-1) / mask.sum(-1)[:, None]
    assert out.shape == (B, C)
    assert jnp.allclose(out, ref, atol=1e-5, rtol=1e-5), (out, ref)

    # --- small case that exercises the tiled/padded accumulator path ---
    B2, C2, L2 = 2, 24, 300
    features2 = jax.random.normal(k2, (B2, C2, L2), dtype=jnp.float32)
    lens2 = jnp.array([200, 130], dtype=jnp.int32)
    mask2 = (jnp.arange(L2)[None, :] < lens2[:, None]).astype(jnp.float32)

    out2 = jax.block_until_ready(
        masked_global_avg_pool1d(mask2, features2, tm=16, tl=128))   # grid=(3, 3), padded rows/cols
    ref2 = features2.sum(-1) / mask2.sum(-1)[:, None]
    assert out2.shape == (B2, C2)
    assert jnp.allclose(out2, ref2, atol=1e-5, rtol=1e-4), (out2, ref2)

    print("KERNEL_OK")
</pallas_src>

<mosaic_0001>
module attributes {stable_mosaic.version = 11 : i64} {
  func.func @_masked_gap_kernel(%arg0: i32, %arg1: i32, %arg2: memref<8x16xf32, #tpu.memory_space<vmem>>, %arg3: memref<8x1xf32, #tpu.memory_space<vmem>>, %arg4: memref<8x1xf32, #tpu.memory_space<vmem>>, %arg5: memref<8x16xf32, #tpu.memory_space<vmem>>) attributes {dimension_semantics = [#tpu.dimension_semantics<parallel>, #tpu.dimension_semantics<arbitrary>], iteration_bounds = array<i64: 1, 1>, scalar_prefetch = 0 : i64, scratch_operands = 1 : i64, tpu.core_type = #tpu.core_type<tc>, window_params = [{transform_indices = @transform_0, window_bounds = array<i64: 8, 16>}, {transform_indices = @transform_1, window_bounds = array<i64: 8, 1>}, {transform_indices = @transform_2, window_bounds = array<i64: 8, 1>}]} {
    %c0_i32 = arith.constant 0 : i32
    %0 = arith.cmpi eq, %arg1, %c0_i32 : i32
    %1 = arith.extui %0 : i1 to i32
    %c0_i32_0 = arith.constant 0 : i32
    %2 = arith.cmpi ne, %1, %c0_i32_0 : i32
    scf.if %2 {
      %cst = arith.constant 0.000000e+00 : f32
      %10 = vector.broadcast %cst : f32 to vector<8x16xf32>
      %c0_8 = arith.constant 0 : index
      %c0_9 = arith.constant 0 : index
      %11 = vector.load %arg5[%c0_8, %c0_9] : memref<8x16xf32, #tpu.memory_space<vmem>>, vector<8x16xf32>
      tpu.vector_store %arg5[%c0_8, %c0_9], %10 {strides = array<i32>} : memref<8x16xf32, #tpu.memory_space<vmem>>, vector<8x16xf32>,
    } else {
    }
    %c0 = arith.constant 0 : index
    %c0_1 = arith.constant 0 : index
    %3 = vector.load %arg2[%c0, %c0_1] : memref<8x16xf32, #tpu.memory_space<vmem>>, vector<8x16xf32>
    %c0_2 = arith.constant 0 : index
    %c0_3 = arith.constant 0 : index
    %4 = vector.load %arg5[%c0_2, %c0_3] : memref<8x16xf32, #tpu.memory_space<vmem>>, vector<8x16xf32>
    %5 = arith.addf %4, %3 : vector<8x16xf32>
    %c0_4 = arith.constant 0 : index
    %c0_5 = arith.constant 0 : index
    %6 = vector.load %arg5[%c0_4, %c0_5] : memref<8x16xf32, #tpu.memory_space<vmem>>, vector<8x16xf32>
    tpu.vector_store %arg5[%c0_4, %c0_5], %5 {strides = array<i32>} : memref<8x16xf32, #tpu.memory_space<vmem>>, vector<8x16xf32>,
    %c0_i32_6 = arith.constant 0 : i32
    %7 = arith.cmpi eq, %arg1, %c0_i32_6 : i32
    %8 = arith.extui %7 : i1 to i32
    %c0_i32_7 = arith.constant 0 : i32
    %9 = arith.cmpi ne, %8, %c0_i32_7 : i32
    scf.if %9 {
      %c0_8 = arith.constant 0 : index
      %c0_9 = arith.constant 0 : index
      %10 = vector.load %arg5[%c0_8, %c0_9] : memref<8x16xf32, #tpu.memory_space<vmem>>, vector<8x16xf32>
      %cst = arith.constant dense<0.000000e+00> : vector<8xf32>
      %11 = vector.multi_reduction <add>, %10, %cst [1] : vector<8x16xf32> to vector<8xf32>
      %12 = vector.shape_cast %11 : vector<8xf32> to vector<8x1xf32>
      %c0_10 = arith.constant 0 : index
      %c0_11 = arith.constant 0 : index
      %13 = vector.load %arg3[%c0_10, %c0_11] : memref<8x1xf32, #tpu.memory_space<vmem>>, vector<8x1xf32>
      %14 = arith.divf %12, %13 : vector<8x1xf32>
      %c0_12 = arith.constant 0 : index
      %c0_13 = arith.constant 0 : index
      %15 = vector.load %arg4[%c0_12, %c0_13] : memref<8x1xf32, #tpu.memory_space<vmem>>, vector<8x1xf32>
      tpu.vector_store %arg4[%c0_12, %c0_13], %14 {strides = array<i32>} : memref<8x1xf32, #tpu.memory_space<vmem>>, vector<8x1xf32>,
    } else {
    }
    return
  }
  func.func @transform_0(%arg0: i32, %arg1: i32) -> (i32, i32) {
    %c0_i32 = arith.constant 0 : i32
    return %arg0, %arg1 : i32, i32
  }
  func.func @transform_1(%arg0: i32, %arg1: i32) -> (i32, i32) {
    %c0_i32 = arith.constant 0 : i32
    %c0_i32_0 = arith.constant 0 : i32
    return %arg0, %c0_i32 : i32, i32
  }
  func.func @transform_2(%arg0: i32, %arg1: i32) -> (i32, i32) {
    %c0_i32 = arith.constant 0 : i32
    %c0_i32_0 = arith.constant 0 : i32
    return %arg0, %c0_i32 : i32, i32
  }
}

</mosaic_0001>

<llo_original>
// kernel: tpu_custom_call.1
$region0: #{tpu_custom_call.1}
  #allocation0 [shape = 'u32[]', space=smem, size = 0x4, offset = 0x4, fixed_abs, tag = 'smem constant byte address 0x4 - core index']
  #allocation1 [shape = 'u32[144,128]{1,0:T(1,128)}', space=vmem, size = 0x12000, scoped, tag = 'internal scratch']
  #allocation2 [shape = 'f32[8,16]{1,0:T(8,128)}', space=vmem, size = 0x1000, scoped, tag = 'scratch operand']
  %s0 = inlined_call_operand.vmem [shape: f32[8,16], index: 0, kind: input, shape index: {}]
  %s1 = inlined_call_operand.vmem [shape: f32[8,1], index: 1, kind: input, shape index: {}]
  %s2 = inlined_call_operand.vmem [shape: f32[8,1], index: 2, kind: output, shape index: {}]
  %s3 = sld [smem:[#allocation0]]
  $region26: #{tpu_custom_call.1} parent=0
    _
  %s5 = ssub.s32 1, %s3
  %s6 = scalar_select 0, %s5, %s3
  // Predicated region
  $region2: #{tpu_custom_call.1} parent=0 // pred_check
    _
  $region3: #{tpu_custom_call.1} parent=0 // pred_check_branch
    %8 = sbr.rel (0) target = $region5
  $region4: #{tpu_custom_call.1} parent=0 // pred_region
    _
  $region5: #{tpu_custom_call.1} parent=0 // pred_fallthru
    _
  // Predicated region
  $region6: #{tpu_custom_call.1} parent=0 // pred_check
    _
  $region7: #{tpu_custom_call.1} parent=0 // pred_check_branch
    %10 = sbr.rel (0) target = $region9
  $region8: #{tpu_custom_call.1} parent=0 // pred_region
    _
  $region9: #{tpu_custom_call.1} parent=0 // pred_fallthru
    _
  %p11 = scmp.eq.s32.totalorder 0, 0
  // Predicated region
  $region10: #{tpu_custom_call.1} parent=0 // pred_check
    %p12 = pneg %p11
  $region11: #{tpu_custom_call.1} parent=0 // pred_check_branch
    %14 = sbr.rel (%p12) target = $region13
  $region12: #{tpu_custom_call.1} parent=0 // pred_region
    %vm15 = vcmask 130048
    %16 = vst.msk [vmem:[#allocation2] sm:$0xff] %vm15, 0.0
  $region13: #{tpu_custom_call.1} parent=0 // pred_fallthru
    _
  %v17 = vld [vmem:[%s0] sm:$0xff]
  %v18 = vld [vmem:[#allocation2] sm:$0xff]
  %v19 = vadd.f32 %v18, %v17
  %vm20 = vcmask 130048
  %21 = vst.msk [vmem:[#allocation2] sm:$0xff] %vm20, %v19
  // Predicated region
  $region14: #{tpu_custom_call.1} parent=0 // pred_check
    %p22 = pneg %p11
  $region15: #{tpu_custom_call.1} parent=0 // pred_check_branch
    %24 = sbr.rel (%p22) target = $region17
  $region16: #{tpu_custom_call.1} parent=0 // pred_region
    %v25 = vld [vmem:[#allocation2] sm:$0xff]
    %v26 = vsel %vm20, %v25, 0.0
    %27 = vadd.xlane.f32.xlu0 %v26
    %v28 = vpop.xlane.xlu0 %27
    %v29 = vld [vmem:[%s1] sm:$0xff]
    %v30 = vrcp.pop %v29
    %v31 = vmul.f32 %v28, %v30
    %vm32 = vcmask 7168
    %33 = vst.msk [vmem:[%s2] sm:$0xff] %vm32, %v31
  $region17: #{tpu_custom_call.1} parent=0 // pred_fallthru
    _
  // Predicated region
  $region18: #{tpu_custom_call.1} parent=0 // pred_check
    _
  $region19: #{tpu_custom_call.1} parent=0 // pred_check_branch
    %35 = sbr.rel (0) target = $region21
  $region20: #{tpu_custom_call.1} parent=0 // pred_region
    _
  $region21: #{tpu_custom_call.1} parent=0 // pred_fallthru
    _
  // Predicated region
  $region22: #{tpu_custom_call.1} parent=0 // pred_check
    _
  $region23: #{tpu_custom_call.1} parent=0 // pred_check_branch
    %37 = sbr.rel (0) target = $region25
  $region24: #{tpu_custom_call.1} parent=0 // pred_region
    _
  $region25: #{tpu_custom_call.1} parent=0 // pred_fallthru
    _

</llo_original>
